<compile_context>
chip_gen: v5e
topology: v5e:2x2
jax: 0.10.0
libtpu: 0.0.40
codegen_flags: <defaults>
</compile_context>

<pallas_src>
import functools

import jax
import jax.numpy as jnp
from jax import lax
from jax.experimental import pallas as pl
from jax.experimental.pallas import tpu as pltpu


def _layernorm_kernel(x_ref, w_ref, b_ref, o_ref, *, bias_free, eps):
    """Channel LayerNorm on one (1, C, TILE_H, W) NCHW block.

    x_ref : (1, C, TILE_H, W)  VMEM input block  (lanes = W, sublanes = rows)
    w_ref : (C,)               SMEM per-channel scale
    b_ref : (C,)               SMEM per-channel bias (ignored when bias_free)
    o_ref : (1, C, TILE_H, W)  VMEM output block
    """
    C = x_ref.shape[1]
    inv_c = 1.0 / C

    # Load each channel plane once: C lane-dense (TILE_H, W) f32 tiles.
    planes = [x_ref[0, c].astype(jnp.float32) for c in range(C)]

    # Mean over channels: C-1 plane adds + 1 scalar mul (pure VPU).
    s = planes[0]
    for c in range(1, C):
        s = s + planes[c]
    mean = s * inv_c

    # Centred diffs, reused for both the variance and (WithBias) the output.
    diffs = [p - mean for p in planes]

    # Population variance (unbiased=False), centred like torch.var.
    v = diffs[0] * diffs[0]
    for c in range(1, C):
        v = v + diffs[c] * diffs[c]
    var = v * inv_c

    # One EUP rsqrt per block, reused for every channel.
    inv = lax.rsqrt(var + eps)

    # Per-channel scale (+ bias); SMEM scalar operands broadcast for free.
    for c in range(C):
        base = planes[c] if bias_free else diffs[c]
        y = base * (inv * w_ref[c])
        if not bias_free:
            y = y + b_ref[c]
        o_ref[0, c] = y.astype(o_ref.dtype)


def _pick_tile_h(H, C, W, itemsize):
    """Largest 8-aligned row strip dividing H whose (C, tile_h, W) block stays within
    ~2 MiB, so double-buffered in+out blocks fit comfortably in scoped VMEM (v5e/v6e/v7x)."""
    budget = 2 << 20
    for th in (256, 128, 64, 32, 16, 8):
        if th <= H and H % th == 0 and C * th * W * itemsize <= budget:
            return th
    # H not 8-aligned (or tiny): block equal to the full H extent is always legal.
    # TODO(synk): also tile W for extreme C*H*W blocks that would not fit VMEM.
    return H


def layernorm_nchw(x, weight, bias=None, *, bias_free=False, eps=1e-5):
    """Channel LayerNorm applied directly in NCHW layout.

    x:      (N, C, H, W)
    weight: (C,)
    bias:   (C,) or None (ignored when bias_free)
    """
    N, C, H, W = x.shape
    if bias is None:
        bias = jnp.zeros((C,), dtype=jnp.float32)
    weight = weight.astype(jnp.float32)
    bias = bias.astype(jnp.float32)

    tile_h = _pick_tile_h(H, C, W, jnp.dtype(x.dtype).itemsize)
    grid = (N, H // tile_h)

    kernel = functools.partial(_layernorm_kernel, bias_free=bias_free, eps=eps)

    return pl.pallas_call(
        kernel,
        out_shape=jax.ShapeDtypeStruct((N, C, H, W), x.dtype),
        grid_spec=pltpu.PrefetchScalarGridSpec(
            num_scalar_prefetch=0,
            grid=grid,
            in_specs=[
                pl.BlockSpec((1, C, tile_h, W), lambda n, h: (n, 0, h, 0)),
                pl.BlockSpec(memory_space=pltpu.MemorySpace.SMEM),  # weight scalars
                pl.BlockSpec(memory_space=pltpu.MemorySpace.SMEM),  # bias scalars
            ],
            out_specs=pl.BlockSpec((1, C, tile_h, W), lambda n, h: (n, 0, h, 0)),
        ),
        compiler_params=pltpu.CompilerParams(
            dimension_semantics=("parallel", "parallel")),
    )(x, weight, bias)


def layernorm_forward(x, weight, bias, layer_norm_type):
    """LayerNorm.forward of the PyTorch module (to_3d / to_4d folded into layout)."""
    bias_free = (layer_norm_type == "BiasFree")
    return layernorm_nchw(x, weight, None if bias_free else bias,
                          bias_free=bias_free)


def _reference(x, weight, bias, bias_free):
    """Pure-JAX reference matching the PyTorch module exactly."""
    xt = jnp.transpose(x, (0, 2, 3, 1)).astype(jnp.float32)   # (N, H, W, C)
    mu = jnp.mean(xt, axis=-1, keepdims=True)
    var = jnp.mean((xt - mu) ** 2, axis=-1, keepdims=True)    # unbiased=False
    if bias_free:
        y = xt / jnp.sqrt(var + 1e-5) * weight
    else:
        y = (xt - mu) / jnp.sqrt(var + 1e-5) * weight + bias
    return jnp.transpose(y, (0, 3, 1, 2)).astype(x.dtype)


if __name__ == "__main__":
    key = jax.random.PRNGKey(0)
    k_x, k_w, k_b = jax.random.split(key, 3)

    # Small shapes consistent with the module: batch=2, dim (channels)=4, spatial=16.
    N, C, H, W = 2, 4, 16, 16
    x = jax.random.normal(k_x, (N, C, H, W), dtype=jnp.float32)
    weight = 1.0 + 0.1 * jax.random.normal(k_w, (C,), dtype=jnp.float32)
    bias = 0.1 * jax.random.normal(k_b, (C,), dtype=jnp.float32)

    # WithBias variant (default branch of the module).
    out_wb = jax.block_until_ready(layernorm_forward(x, weight, bias, "WithBias"))
    ref_wb = jax.block_until_ready(_reference(x, weight, bias, bias_free=False))
    assert out_wb.shape == (N, C, H, W), out_wb.shape
    assert jnp.allclose(out_wb, ref_wb, rtol=1e-5, atol=1e-5), "WithBias mismatch"

    # BiasFree variant.
    out_bf = jax.block_until_ready(layernorm_forward(x, weight, None, "BiasFree"))
    ref_bf = jax.block_until_ready(_reference(x, weight, None, bias_free=True))
    assert out_bf.shape == (N, C, H, W), out_bf.shape
    assert jnp.allclose(out_bf, ref_bf, rtol=1e-5, atol=1e-5), "BiasFree mismatch"

    print("KERNEL_OK")
</pallas_src>

<mosaic_0001>
module attributes {stable_mosaic.version = 11 : i64} {
  func.func @_layernorm_kernel(%arg0: i32, %arg1: i32, %arg2: memref<1x4x16x16xf32, #tpu.memory_space<vmem>>, %arg3: memref<4xf32, #tpu.memory_space<smem>>, %arg4: memref<4xf32, #tpu.memory_space<smem>>, %arg5: memref<1x4x16x16xf32, #tpu.memory_space<vmem>>) attributes {dimension_semantics = [#tpu.dimension_semantics<parallel>, #tpu.dimension_semantics<parallel>], iteration_bounds = array<i64: 2, 1>, scalar_prefetch = 0 : i64, scratch_operands = 0 : i64, tpu.core_type = #tpu.core_type<tc>, window_params = [{transform_indices = @transform_0, window_bounds = array<i64: 1, 4, 16, 16>}, {transform_indices = @transform_1, window_bounds = array<i64: 4>}, {transform_indices = @transform_2, window_bounds = array<i64: 4>}, {transform_indices = @transform_3, window_bounds = array<i64: 1, 4, 16, 16>}]} {
    %c0 = arith.constant 0 : index
    %c0_0 = arith.constant 0 : index
    %c0_1 = arith.constant 0 : index
    %c0_2 = arith.constant 0 : index
    %0 = vector.load %arg2[%c0, %c0_0, %c0_1, %c0_2] : memref<1x4x16x16xf32, #tpu.memory_space<vmem>>, vector<1x1x16x16xf32>
    %1 = vector.shape_cast %0 : vector<1x1x16x16xf32> to vector<16x16xf32>
    %c0_3 = arith.constant 0 : index
    %c1 = arith.constant 1 : index
    %c0_4 = arith.constant 0 : index
    %c0_5 = arith.constant 0 : index
    %2 = vector.load %arg2[%c0_3, %c1, %c0_4, %c0_5] : memref<1x4x16x16xf32, #tpu.memory_space<vmem>>, vector<1x1x16x16xf32>
    %3 = vector.shape_cast %2 : vector<1x1x16x16xf32> to vector<16x16xf32>
    %c0_6 = arith.constant 0 : index
    %c2 = arith.constant 2 : index
    %c0_7 = arith.constant 0 : index
    %c0_8 = arith.constant 0 : index
    %4 = vector.load %arg2[%c0_6, %c2, %c0_7, %c0_8] : memref<1x4x16x16xf32, #tpu.memory_space<vmem>>, vector<1x1x16x16xf32>
    %5 = vector.shape_cast %4 : vector<1x1x16x16xf32> to vector<16x16xf32>
    %c0_9 = arith.constant 0 : index
    %c3 = arith.constant 3 : index
    %c0_10 = arith.constant 0 : index
    %c0_11 = arith.constant 0 : index
    %6 = vector.load %arg2[%c0_9, %c3, %c0_10, %c0_11] : memref<1x4x16x16xf32, #tpu.memory_space<vmem>>, vector<1x1x16x16xf32>
    %7 = vector.shape_cast %6 : vector<1x1x16x16xf32> to vector<16x16xf32>
    %8 = arith.addf %1, %3 : vector<16x16xf32>
    %9 = arith.addf %8, %5 : vector<16x16xf32>
    %10 = arith.addf %9, %7 : vector<16x16xf32>
    %cst = arith.constant 2.500000e-01 : f32
    %11 = vector.broadcast %cst : f32 to vector<16x16xf32>
    %12 = arith.mulf %10, %11 : vector<16x16xf32>
    %13 = arith.subf %1, %12 : vector<16x16xf32>
    %14 = arith.subf %3, %12 : vector<16x16xf32>
    %15 = arith.subf %5, %12 : vector<16x16xf32>
    %16 = arith.subf %7, %12 : vector<16x16xf32>
    %17 = arith.mulf %13, %13 : vector<16x16xf32>
    %18 = arith.mulf %14, %14 : vector<16x16xf32>
    %19 = arith.addf %17, %18 : vector<16x16xf32>
    %20 = arith.mulf %15, %15 : vector<16x16xf32>
    %21 = arith.addf %19, %20 : vector<16x16xf32>
    %22 = arith.mulf %16, %16 : vector<16x16xf32>
    %23 = arith.addf %21, %22 : vector<16x16xf32>
    %cst_12 = arith.constant 2.500000e-01 : f32
    %24 = vector.broadcast %cst_12 : f32 to vector<16x16xf32>
    %25 = arith.mulf %23, %24 : vector<16x16xf32>
    %cst_13 = arith.constant 9.99999974E-6 : f32
    %26 = vector.broadcast %cst_13 : f32 to vector<16x16xf32>
    %27 = arith.addf %25, %26 : vector<16x16xf32>
    %28 = math.rsqrt %27 : vector<16x16xf32>
    %c0_14 = arith.constant 0 : index
    %29 = memref.load %arg3[%c0_14] : memref<4xf32, #tpu.memory_space<smem>>
    %30 = vector.broadcast %29 : f32 to vector<16x16xf32>
    %31 = arith.mulf %28, %30 : vector<16x16xf32>
    %32 = arith.mulf %13, %31 : vector<16x16xf32>
    %c0_15 = arith.constant 0 : index
    %33 = memref.load %arg4[%c0_15] : memref<4xf32, #tpu.memory_space<smem>>
    %34 = vector.broadcast %33 : f32 to vector<16x16xf32>
    %35 = arith.addf %32, %34 : vector<16x16xf32>
    %c0_16 = arith.constant 0 : index
    %c0_17 = arith.constant 0 : index
    %c0_18 = arith.constant 0 : index
    %c0_19 = arith.constant 0 : index
    %36 = vector.load %arg5[%c0_16, %c0_17, %c0_18, %c0_19] : memref<1x4x16x16xf32, #tpu.memory_space<vmem>>, vector<1x1x16x16xf32>
    %37 = vector.shape_cast %36 : vector<1x1x16x16xf32> to vector<16x16xf32>
    %38 = vector.shape_cast %35 : vector<16x16xf32> to vector<1x1x16x16xf32>
    tpu.vector_store %arg5[%c0_16, %c0_17, %c0_18, %c0_19], %38 {strides = array<i32>} : memref<1x4x16x16xf32, #tpu.memory_space<vmem>>, vector<1x1x16x16xf32>,
    %c1_20 = arith.constant 1 : index
    %39 = memref.load %arg3[%c1_20] : memref<4xf32, #tpu.memory_space<smem>>
    %40 = vector.broadcast %39 : f32 to vector<16x16xf32>
    %41 = arith.mulf %28, %40 : vector<16x16xf32>
    %42 = arith.mulf %14, %41 : vector<16x16xf32>
    %c1_21 = arith.constant 1 : index
    %43 = memref.load %arg4[%c1_21] : memref<4xf32, #tpu.memory_space<smem>>
    %44 = vector.broadcast %43 : f32 to vector<16x16xf32>
    %45 = arith.addf %42, %44 : vector<16x16xf32>
    %c0_22 = arith.constant 0 : index
    %c1_23 = arith.constant 1 : index
    %c0_24 = arith.constant 0 : index
    %c0_25 = arith.constant 0 : index
    %46 = vector.load %arg5[%c0_22, %c1_23, %c0_24, %c0_25] : memref<1x4x16x16xf32, #tpu.memory_space<vmem>>, vector<1x1x16x16xf32>
    %47 = vector.shape_cast %46 : vector<1x1x16x16xf32> to vector<16x16xf32>
    %48 = vector.shape_cast %45 : vector<16x16xf32> to vector<1x1x16x16xf32>
    tpu.vector_store %arg5[%c0_22, %c1_23, %c0_24, %c0_25], %48 {strides = array<i32>} : memref<1x4x16x16xf32, #tpu.memory_space<vmem>>, vector<1x1x16x16xf32>,
    %c2_26 = arith.constant 2 : index
    %49 = memref.load %arg3[%c2_26] : memref<4xf32, #tpu.memory_space<smem>>
    %50 = vector.broadcast %49 : f32 to vector<16x16xf32>
    %51 = arith.mulf %28, %50 : vector<16x16xf32>
    %52 = arith.mulf %15, %51 : vector<16x16xf32>
    %c2_27 = arith.constant 2 : index
    %53 = memref.load %arg4[%c2_27] : memref<4xf32, #tpu.memory_space<smem>>
    %54 = vector.broadcast %53 : f32 to vector<16x16xf32>
    %55 = arith.addf %52, %54 : vector<16x16xf32>
    %c0_28 = arith.constant 0 : index
    %c2_29 = arith.constant 2 : index
    %c0_30 = arith.constant 0 : index
    %c0_31 = arith.constant 0 : index
    %56 = vector.load %arg5[%c0_28, %c2_29, %c0_30, %c0_31] : memref<1x4x16x16xf32, #tpu.memory_space<vmem>>, vector<1x1x16x16xf32>
    %57 = vector.shape_cast %56 : vector<1x1x16x16xf32> to vector<16x16xf32>
    %58 = vector.shape_cast %55 : vector<16x16xf32> to vector<1x1x16x16xf32>
    tpu.vector_store %arg5[%c0_28, %c2_29, %c0_30, %c0_31], %58 {strides = array<i32>} : memref<1x4x16x16xf32, #tpu.memory_space<vmem>>, vector<1x1x16x16xf32>,
    %c3_32 = arith.constant 3 : index
    %59 = memref.load %arg3[%c3_32] : memref<4xf32, #tpu.memory_space<smem>>
    %60 = vector.broadcast %59 : f32 to vector<16x16xf32>
    %61 = arith.mulf %28, %60 : vector<16x16xf32>
    %62 = arith.mulf %16, %61 : vector<16x16xf32>
    %c3_33 = arith.constant 3 : index
    %63 = memref.load %arg4[%c3_33] : memref<4xf32, #tpu.memory_space<smem>>
    %64 = vector.broadcast %63 : f32 to vector<16x16xf32>
    %65 = arith.addf %62, %64 : vector<16x16xf32>
    %c0_34 = arith.constant 0 : index
    %c3_35 = arith.constant 3 : index
    %c0_36 = arith.constant 0 : index
    %c0_37 = arith.constant 0 : index
    %66 = vector.load %arg5[%c0_34, %c3_35, %c0_36, %c0_37] : memref<1x4x16x16xf32, #tpu.memory_space<vmem>>, vector<1x1x16x16xf32>
    %67 = vector.shape_cast %66 : vector<1x1x16x16xf32> to vector<16x16xf32>
    %68 = vector.shape_cast %65 : vector<16x16xf32> to vector<1x1x16x16xf32>
    tpu.vector_store %arg5[%c0_34, %c3_35, %c0_36, %c0_37], %68 {strides = array<i32>} : memref<1x4x16x16xf32, #tpu.memory_space<vmem>>, vector<1x1x16x16xf32>,
    return
  }
  func.func @transform_0(%arg0: i32, %arg1: i32) -> (i32, i32, i32, i32) {
    %c0_i32 = arith.constant 0 : i32
    %c0_i32_0 = arith.constant 0 : i32
    %c0_i32_1 = arith.constant 0 : i32
    return %arg0, %c0_i32, %arg1, %c0_i32_0 : i32, i32, i32, i32
  }
  func.func @transform_1(%arg0: i32, %arg1: i32) -> i32 {
    %c0_i32 = arith.constant 0 : i32
    %c0_i32_0 = arith.constant 0 : i32
    return %c0_i32 : i32
  }
  func.func @transform_2(%arg0: i32, %arg1: i32) -> i32 {
    %c0_i32 = arith.constant 0 : i32
    %c0_i32_0 = arith.constant 0 : i32
    return %c0_i32 : i32
  }
  func.func @transform_3(%arg0: i32, %arg1: i32) -> (i32, i32, i32, i32) {
    %c0_i32 = arith.constant 0 : i32
    %c0_i32_0 = arith.constant 0 : i32
    %c0_i32_1 = arith.constant 0 : i32
    return %arg0, %c0_i32, %arg1, %c0_i32_0 : i32, i32, i32, i32
  }
}

</mosaic_0001>

<llo_original>
// kernel: tpu_custom_call.1
$region0: #{tpu_custom_call.1}
  #allocation0 [shape = 'u32[]', space=smem, size = 0x4, offset = 0x4, fixed_abs, tag = 'smem constant byte address 0x4 - core index']
  #allocation1 [shape = 'u32[72,128]{1,0:T(1,128)}', space=vmem, size = 0x9000, scoped, tag = 'internal scratch']
  %s0 = inlined_call_operand.hbm [shape: f32[2,4,16,16], index: 0, kind: input, shape index: {}]
  %s1 = inlined_call_operand.hbm [shape: f32[4], index: 1, kind: input, shape index: {}]
  %s2 = inlined_call_operand.vmem [shape: f32[4], index: 2, kind: input, shape index: {}]
  %s3 = inlined_call_operand.hbm [shape: f32[2,4,16,16], index: 3, kind: output, shape index: {}]
  %s4 = sld [smem:[#allocation0]]
  $region57: #{tpu_custom_call.1} parent=0
    _
  %s6 = ssub.s32 1, %s4
  %s7 = scalar_select 0, %s6, %s4
  $region1: #{tpu_custom_call.1} parent=0
    #allocation2 [shape = 'u8[65536]{0}', space=vmem, size = 0x10000, scoped, tag = 'input window, operand 0']
    #allocation3 [shape = 's32[2]{0}', space=sflag, size = 0x8, scoped, tag = 'scoped memory for tpu_custom_call.1']
    #allocation4 [shape = 's32[2]{0}', space=sflag, size = 0x8, scoped, tag = 'scoped memory for tpu_custom_call.1']
    #allocation5 [shape = 's32[2]{0}', space=sflag, size = 0x8, scoped, tag = 'scoped memory for tpu_custom_call.1']
    #allocation6 [shape = 's32[2]{0}', space=sflag, size = 0x8, scoped, tag = 'scoped memory for tpu_custom_call.1']
    #allocation7 [shape = 'u8[512]{0}', space=smem, size = 0x200, scoped, tag = 'input window, operand 1, single buffered']
    #allocation8 [shape = 'u8[512]{0}', space=smem, size = 0x200, scoped, tag = 'input window, operand 2, single buffered']
    #allocation9 [shape = 'u8[65536]{0}', space=vmem, size = 0x10000, scoped, tag = 'output window, operand 0']
    %8 = vsyncpa [#allocation3], 0
    %s9 = scalar_lea.sflag [#allocation3], 1
    %10 = vsyncpa %s9, 0
    %11 = vsyncpa [#allocation5], 0
    %12 = vsyncpa [#allocation6], 0
    %13 = vsyncpa [#allocation4], 0
    %s14 = scalar_lea.sflag [#allocation4], 1
    %15 = vsyncpa %s14, 0
    loop: start=0, step=1, limit=4
    $region2: #{tpu_custom_call.1} parent=1 // loop_pre_header
      _
    $region3: #{tpu_custom_call.1} parent=1 // loop_header
      %s17 = sphi 0, %s21
      %p18 = scmp.ge.s32.totalorder %s17, 4
      %s24 = sphi 0, %s36
      %s25 = sphi 0, %s32
      %s26 = sphi 0, %s24
      %s27 = sphi 0, %s25
      %s28 = sphi 0, %s26
      %s29 = sphi 0, %s27
      %s41 = sphi 0, %s43
      %s44 = sphi 0, %s41
      %s45 = sphi 0, %s44
      %s61 = sphi 0, %s45
      %s65 = sphi 0, %s65
      %s67 = sphi 0, %s65
      %s68 = sphi 0, %s67
      %s82 = sphi 0, %s68
      %s86 = sphi 0, %s86
      %s88 = sphi 0, %s86
      %s89 = sphi 0, %s88
      %s103 = sphi 0, %s89
      %s111 = sphi 0, %s113
      %s114 = sphi 0, %s111
      %s115 = sphi 0, %s114
      %s131 = sphi 0, %s115
    $region4: #{tpu_custom_call.1} parent=1 // loop_header_branch
      %20 = sbr.rel (%p18) target = $region8
    $region5: #{tpu_custom_call.1} parent=1 // loop_body
      %s22 = ssub.s32 %s17, 1
      %s23 = ssub.s32 %s17, 2
      %s30 = sadd.s32 1, %s25
      %p31 = scmp.ge.s32.totalorder %s30, 1
      %s32 = scalar_select %p31, 0, %s30
      %s33 = sadd.s32 1, %s24
      %s34 = scalar_select %p31, %s33, %s24
      %p35 = scmp.ge.s32.totalorder %s34, 2
      %s36 = scalar_select %p35, 0, %s34
      %s37 = ssub.s32 %s24, %s36
      %s38 = ssub.s32 %s25, %s32
      %s39 = sor.u32 %s37, %s38
      %p40 = scmp.eq.s32.totalorder %s39, 0
      %s42 = sadd.s32 %s41, 1
      %s43 = scalar_select %p40, %s41, %s42
      %p46 = pneg %p40
      %p47 = scmp.eq.s32.totalorder %s17, 1
      %p48 = por %p46, %p47
      %p49 = scmp.ne.s32.totalorder %s41, %s44
      %p50 = scmp.eq.s32.totalorder %s17, 0
      %p51 = por %p49, %p50
      %p52 = scmp.ne.s32.totalorder %s41, %s44
      %p53 = scmp.eq.s32.totalorder %s22, 1
      %p54 = por %p52, %p53
      %p55 = scmp.ne.s32.totalorder %s44, %s45
      %p56 = scmp.eq.s32.totalorder %s22, 0
      %p57 = por %p55, %p56
      %p58 = scmp.ne.s32.totalorder %s44, %s45
      %p59 = scmp.eq.s32.totalorder %s23, 1
      %p60 = por %p58, %p59
      %p62 = scmp.ne.s32.totalorder %s45, %s61
      %p63 = scmp.eq.s32.totalorder %s23, 0
      %p64 = por %p62, %p63
      %s66 = sadd.s32 %s65, 1
      %p69 = scmp.eq.s32.totalorder %s17, 1
      %p70 = scmp.ne.s32.totalorder %s65, %s67
      %p71 = scmp.eq.s32.totalorder %s17, 0
      %p72 = por %p70, %p71
      %p73 = scmp.ne.s32.totalorder %s65, %s67
      %p74 = scmp.eq.s32.totalorder %s22, 1
      %p75 = por %p73, %p74
      %p76 = scmp.ne.s32.totalorder %s67, %s68
      %p77 = scmp.eq.s32.totalorder %s22, 0
      %p78 = por %p76, %p77
      %p79 = scmp.ne.s32.totalorder %s67, %s68
      %p80 = scmp.eq.s32.totalorder %s23, 1
      %p81 = por %p79, %p80
      %p83 = scmp.ne.s32.totalorder %s68, %s82
      %p84 = scmp.eq.s32.totalorder %s23, 0
      %p85 = por %p83, %p84
      %s87 = sadd.s32 %s86, 1
      %p90 = scmp.eq.s32.totalorder %s17, 1
      %p91 = scmp.ne.s32.totalorder %s86, %s88
      %p92 = scmp.eq.s32.totalorder %s17, 0
      %p93 = por %p91, %p92
      %p94 = scmp.ne.s32.totalorder %s86, %s88
      %p95 = scmp.eq.s32.totalorder %s22, 1
      %p96 = por %p94, %p95
      %p97 = scmp.ne.s32.totalorder %s88, %s89
      %p98 = scmp.eq.s32.totalorder %s22, 0
      %p99 = por %p97, %p98
      %p100 = scmp.ne.s32.totalorder %s88, %s89
      %p101 = scmp.eq.s32.totalorder %s23, 1
      %p102 = por %p100, %p101
      %p104 = scmp.ne.s32.totalorder %s89, %s103
      %p105 = scmp.eq.s32.totalorder %s23, 0
      %p106 = por %p104, %p105
      %s107 = ssub.s32 %s24, %s36
      %s108 = ssub.s32 %s25, %s32
      %s109 = sor.u32 %s107, %s108
      %p110 = scmp.eq.s32.totalorder %s109, 0
      %s112 = sadd.s32 %s111, 1
      %s113 = scalar_select %p110, %s111, %s112
      %p116 = pneg %p110
      %p117 = scmp.eq.s32.totalorder %s17, 1
      %p118 = por %p116, %p117
      %p119 = scmp.ne.s32.totalorder %s111, %s114
      %p120 = scmp.eq.s32.totalorder %s17, 0
      %p121 = por %p119, %p120
      %p122 = scmp.ne.s32.totalorder %s111, %s114
      %p123 = scmp.eq.s32.totalorder %s22, 1
      %p124 = por %p122, %p123
      %p125 = scmp.ne.s32.totalorder %s114, %s115
      %p126 = scmp.eq.s32.totalorder %s22, 0
      %p127 = por %p125, %p126
      %p128 = scmp.ne.s32.totalorder %s114, %s115
      %p129 = scmp.eq.s32.totalorder %s23, 1
      %p130 = por %p128, %p129
      %p132 = scmp.ne.s32.totalorder %s115, %s131
      %p133 = scmp.eq.s32.totalorder %s23, 0
      %p134 = por %p132, %p133
      %p135 = scmp.le.s32.totalorder 1, %s17
      %p136 = scmp.lt.s32.totalorder %s17, 3
      %p137 = pnand %p135, %p136
      %p138 = pneg %p137
      // Predicated region
      $region9: #{tpu_custom_call.1} parent=5 // pred_check
        _
      $region10: #{tpu_custom_call.1} parent=5 // pred_check_branch
        %140 = sbr.rel (%p137) target = $region12
      $region11: #{tpu_custom_call.1} parent=5 // pred_region
        %s141 = ssub.s32 %s17, 1
        // Predicated region
        $region13: #{tpu_custom_call.1} parent=11 // pred_check
          %p142 = pneg %p78
        $region14: #{tpu_custom_call.1} parent=11 // pred_check_branch
          %144 = sbr.rel (%p142) target = $region16
        $region15: #{tpu_custom_call.1} parent=11 // pred_region
          %146 = vsyncadd [#allocation5], 0
          %s148 = sshll.u32 %s1, 4
          %s149 = int_to_ptr.hbm [resolvable:$true] %s148
          %151 = dma.hbm_to_smem %s149, 16, [#allocation7], [#allocation5]
        $region16: #{tpu_custom_call.1} parent=11 // pred_fallthru
          _
        // Predicated region
        $region17: #{tpu_custom_call.1} parent=11 // pred_check
          %p152 = pneg %p99
        $region18: #{tpu_custom_call.1} parent=11 // pred_check_branch
          %154 = sbr.rel (%p152) target = $region20
        $region19: #{tpu_custom_call.1} parent=11 // pred_region
          %156 = vsyncadd [#allocation6], 0
          %s158 = sshll.u32 %s2, 4
          %s159 = int_to_ptr.vmem [resolvable:$true] %s158
          %161 = dma.vmem_to_smem %s159, 16, [#allocation8], [#allocation6]
        $region20: #{tpu_custom_call.1} parent=11 // pred_fallthru
          _
      $region12: #{tpu_custom_call.1} parent=5 // pred_fallthru
        _
      %p162 = scmp.lt.s32.totalorder %s17, 2
      // Predicated region
      $region21: #{tpu_custom_call.1} parent=5 // pred_check
        %p163 = pneg %p162
      $region22: #{tpu_custom_call.1} parent=5 // pred_check_branch
        %165 = sbr.rel (%p163) target = $region24
      $region23: #{tpu_custom_call.1} parent=5 // pred_region
        // Predicated region
        $region25: #{tpu_custom_call.1} parent=23 // pred_check
          %p166 = pneg %p51
        $region26: #{tpu_custom_call.1} parent=23 // pred_check_branch
          %168 = sbr.rel (%p166) target = $region28
        $region27: #{tpu_custom_call.1} parent=23 // pred_region
          %s169 = sand.u32 %s41, 1
          %s170 = scalar_lea.sflag [#allocation3], %s169
          %s171 = sand.u32 %s41, 1
          %s172 = smul.addr %s171, 64
          %s173 = scalar_lea.vmem [#allocation2], %s172
          %s174 = smul.u32 2, %s25
          %176 = vsyncadd %s170, 0
          %s177 = smul.addr %s24, 8
          %s178 = sadd.s32 %s174, %s177
          %s179 = smul.addr %s178, 8
          %s180 = scalar_lea.hbm %s0, %s179
          %s181 = sshll.u32 %s180, 4
          %s182 = int_to_ptr.hbm [resolvable:$true] %s181
          %s183 = sshll.u32 %s173, 4
          %s184 = int_to_ptr.vmem [resolvable:$true] %s183
          %189 = dma.hbm_to_vmem [thread:$0]  %s182, 1024, %s184, %s170, 128, 128, 8
        $region28: #{tpu_custom_call.1} parent=23 // pred_fallthru
          _
      $region24: #{tpu_custom_call.1} parent=5 // pred_fallthru
        _
      %p190 = scmp.le.s32.totalorder 1, %s17
      %p191 = scmp.lt.s32.totalorder %s17, 3
      %p192 = pnand %p190, %p191
      %p193 = pneg %p192
      // Predicated region
      $region29: #{tpu_custom_call.1} parent=5 // pred_check
        _
      $region30: #{tpu_custom_call.1} parent=5 // pred_check_branch
        %195 = sbr.rel (%p192) target = $region32
      $region31: #{tpu_custom_call.1} parent=5 // pred_region
        %s196 = ssub.s32 %s17, 1
        %s197 = sand.u32 %s44, 1
        %s198 = scalar_lea.sflag [#allocation3], %s197
        %s199 = sand.u32 %s44, 1
        %s200 = smul.addr %s199, 64
        %s201 = scalar_lea.vmem [#allocation2], %s200
        // Predicated region
        $region33: #{tpu_custom_call.1} parent=31 // pred_check
          %p202 = pneg %p57
        $region34: #{tpu_custom_call.1} parent=31 // pred_check_branch
          %204 = sbr.rel (%p202) target = $region36
        $region35: #{tpu_custom_call.1} parent=31 // pred_region
          %206 = dma.done %s198, 1024
        $region36: #{tpu_custom_call.1} parent=31 // pred_fallthru
          _
        // Predicated region
        $region37: #{tpu_custom_call.1} parent=31 // pred_check
          %p207 = pneg %p78
        $region38: #{tpu_custom_call.1} parent=31 // pred_check_branch
          %209 = sbr.rel (%p207) target = $region40
        $region39: #{tpu_custom_call.1} parent=31 // pred_region
          %211 = dma.done [#allocation5], 16
        $region40: #{tpu_custom_call.1} parent=31 // pred_fallthru
          _
        // Predicated region
        $region41: #{tpu_custom_call.1} parent=31 // pred_check
          %p212 = pneg %p99
        $region42: #{tpu_custom_call.1} parent=31 // pred_check_branch
          %214 = sbr.rel (%p212) target = $region44
        $region43: #{tpu_custom_call.1} parent=31 // pred_region
          %216 = dma.done [#allocation6], 16
        $region44: #{tpu_custom_call.1} parent=31 // pred_fallthru
          _
        %217 = sfence
        %s218 = sand.u32 %s44, 1
        %s219 = scalar_lea.sflag [#allocation3], %s218
        %s220 = sand.u32 %s44, 1
        %s221 = smul.addr %s220, 64
        %s222 = scalar_lea.vmem [#allocation2], %s221
        %p223 = pneg %p57
        %p224 = pneg %p54
        %p225 = pneg %p78
        %p226 = pneg %p75
        %p227 = pneg %p99
        %p228 = pneg %p96
        %p229 = pneg %p127
        %p230 = pneg %p124
        %s231 = sand.u32 %s114, 1
        %s232 = scalar_lea.sflag [#allocation4], %s231
        %s233 = sand.u32 %s114, 1
        %s234 = smul.addr %s233, 64
        %s235 = scalar_lea.vmem [#allocation9], %s234
        %s236 = smul.u32 2, %s27
        %s237 = smul.u32 2, %s27
        %v238 = vld [vmem:[%s201] sm:$0xff]
        %v239 = vld [vmem:[%s201 + $0x8] sm:$0xff]
        %s240 = scalar_lea.vmem %s201, 16 [#allocation2]
        %v241 = vld [vmem:[%s240] sm:$0xff]
        %v242 = vld [vmem:[%s240 + $0x8] sm:$0xff]
        %s243 = scalar_lea.vmem %s201, 32 [#allocation2]
        %v244 = vld [vmem:[%s243] sm:$0xff]
        %v245 = vld [vmem:[%s243 + $0x8] sm:$0xff]
        %s246 = scalar_lea.vmem %s201, 48 [#allocation2]
        %v247 = vld [vmem:[%s246] sm:$0xff]
        %v248 = vld [vmem:[%s246 + $0x8] sm:$0xff]
        %v249 = vadd.f32 %v238, %v241
        %v250 = vadd.f32 %v239, %v242
        %v251 = vadd.f32 %v249, %v244
        %v252 = vadd.f32 %v250, %v245
        %v253 = vadd.f32 %v251, %v247
        %v254 = vadd.f32 %v252, %v248
        %v255 = vmul.f32 %v253, 0.25
        %v256 = vmul.f32 %v254, 0.25
        %v257 = vsub.f32 %v238, %v255
        %v258 = vsub.f32 %v239, %v256
        %v259 = vsub.f32 %v241, %v255
        %v260 = vsub.f32 %v242, %v256
        %v261 = vsub.f32 %v244, %v255
        %v262 = vsub.f32 %v245, %v256
        %v263 = vsub.f32 %v247, %v255
        %v264 = vsub.f32 %v248, %v256
        %v265 = vmul.f32 %v257, %v257
        %v266 = vmul.f32 %v258, %v258
        %v267 = vmul.f32 %v259, %v259
        %v268 = vmul.f32 %v260, %v260
        %v269 = vadd.f32 %v265, %v267
        %v270 = vadd.f32 %v266, %v268
        %v271 = vmul.f32 %v261, %v261
        %v272 = vmul.f32 %v262, %v262
        %v273 = vadd.f32 %v269, %v271
        %v274 = vadd.f32 %v270, %v272
        %v275 = vmul.f32 %v263, %v263
        %v276 = vmul.f32 %v264, %v264
        %v277 = vadd.f32 %v273, %v275
        %v278 = vadd.f32 %v274, %v276
        %v279 = vmul.f32 %v277, 0.25
        %v280 = vmul.f32 %v278, 0.25
        %v281 = vadd.f32 %v279, 1e-05
        %v282 = vadd.f32 %v280, 1e-05
        %v283 = vrsqrt.pop %v281
        %v284 = vmul.f32 %v283, %v281
        %v285 = vmul.f32 %v284, %v283
        %v286 = vmul.f32 0.5, %v285
        %v287 = vsub.f32 1.5, %v286
        %v288 = vmul.f32 %v283, %v287
        %vm289 = vweird.f32 %v281
        %vm290 = vweird.f32 %v283
        %vm291 = vmor %vm289, %vm290
        %v292 = vsel %vm291, %v283, %v288
        %v293 = vrsqrt.pop %v282
        %v294 = vmul.f32 %v293, %v282
        %v295 = vmul.f32 %v294, %v293
        %v296 = vmul.f32 0.5, %v295
        %v297 = vsub.f32 1.5, %v296
        %v298 = vmul.f32 %v293, %v297
        %vm299 = vweird.f32 %v282
        %vm300 = vweird.f32 %v293
        %vm301 = vmor %vm299, %vm300
        %v302 = vsel %vm301, %v293, %v298
        %s303 = sld [smem:[#allocation7]]
        %v304 = vstv %s303
        %v305 = vmul.f32 %v292, %v304
        %v306 = vmul.f32 %v302, %v304
        %v307 = vmul.f32 %v257, %v305
        %v308 = vmul.f32 %v258, %v306
        %s309 = sld [smem:[#allocation8]]
        %v310 = vstv %s309
        %v311 = vadd.f32 %v307, %v310
        %v312 = vadd.f32 %v308, %v310
        %vm313 = vcmask 130048
        %314 = vst.msk [vmem:[%s235] sm:$0xff] %vm313, %v311
        %315 = vst.msk [vmem:[%s235 + $0x8] sm:$0xff] %vm313, %v312
        %s316 = sld [smem:[#allocation7 + $0x1]]
        %v317 = vstv %s316
        %v318 = vmul.f32 %v292, %v317
        %v319 = vmul.f32 %v302, %v317
        %v320 = vmul.f32 %v259, %v318
        %v321 = vmul.f32 %v260, %v319
        %s322 = sld [smem:[#allocation8 + $0x1]]
        %v323 = vstv %s322
        %v324 = vadd.f32 %v320, %v323
        %v325 = vadd.f32 %v321, %v323
        %s326 = scalar_lea.vmem %s235, 16 [#allocation9]
        %327 = vst.msk [vmem:[%s326] sm:$0xff] %vm313, %v324
        %328 = vst.msk [vmem:[%s326 + $0x8] sm:$0xff] %vm313, %v325
        %s329 = sld [smem:[#allocation7 + $0x2]]
        %v330 = vstv %s329
        %v331 = vmul.f32 %v292, %v330
        %v332 = vmul.f32 %v302, %v330
        %v333 = vmul.f32 %v261, %v331
        %v334 = vmul.f32 %v262, %v332
        %s335 = sld [smem:[#allocation8 + $0x2]]
        %v336 = vstv %s335
        %v337 = vadd.f32 %v333, %v336
        %v338 = vadd.f32 %v334, %v336
        %s339 = scalar_lea.vmem %s235, 32 [#allocation9]
        %340 = vst.msk [vmem:[%s339] sm:$0xff] %vm313, %v337
        %341 = vst.msk [vmem:[%s339 + $0x8] sm:$0xff] %vm313, %v338
        %s342 = sld [smem:[#allocation7 + $0x3]]
        %v343 = vstv %s342
        %v344 = vmul.f32 %v292, %v343
        %v345 = vmul.f32 %v302, %v343
        %v346 = vmul.f32 %v263, %v344
        %v347 = vmul.f32 %v264, %v345
        %s348 = sld [smem:[#allocation8 + $0x3]]
        %v349 = vstv %s348
        %v350 = vadd.f32 %v346, %v349
        %v351 = vadd.f32 %v347, %v349
        %s352 = scalar_lea.vmem %s235, 48 [#allocation9]
        %353 = vst.msk [vmem:[%s352] sm:$0xff] %vm313, %v350
        %354 = vst.msk [vmem:[%s352 + $0x8] sm:$0xff] %vm313, %v351
        %s355 = sand.u32 %s114, 1
        %s356 = scalar_lea.sflag [#allocation4], %s355
        %s357 = sand.u32 %s114, 1
        %s358 = smul.addr %s357, 64
        %s359 = scalar_lea.vmem [#allocation9], %s358
        // Predicated region
        $region45: #{tpu_custom_call.1} parent=31 // pred_check
          %p360 = pneg %p124
        $region46: #{tpu_custom_call.1} parent=31 // pred_check_branch
          %362 = sbr.rel (%p360) target = $region48
        $region47: #{tpu_custom_call.1} parent=31 // pred_region
          %s363 = smul.u32 2, %s27
          %365 = vsyncadd %s356, 0
          %s366 = smul.addr %s26, 8
          %s367 = sadd.s32 %s363, %s366
          %s368 = smul.addr %s367, 8
          %s369 = scalar_lea.hbm %s3, %s368
          %s370 = sshll.u32 %s359, 4
          %s371 = int_to_ptr.vmem [resolvable:$true] %s370
          %s372 = sshll.u32 %s369, 4
          %s373 = int_to_ptr.hbm [resolvable:$true] %s372
          %378 = dma.vmem_to_hbm [thread:$0]  %s371, 1024, %s373, %s356, 128, 128, 8
        $region48: #{tpu_custom_call.1} parent=31 // pred_fallthru
          _
      $region32: #{tpu_custom_call.1} parent=5 // pred_fallthru
        _
      %p379 = scmp.le.s32.totalorder 2, %s17
      // Predicated region
      $region49: #{tpu_custom_call.1} parent=5 // pred_check
        %p380 = pneg %p379
      $region50: #{tpu_custom_call.1} parent=5 // pred_check_branch
        %382 = sbr.rel (%p380) target = $region52
      $region51: #{tpu_custom_call.1} parent=5 // pred_region
        %s383 = ssub.s32 %s17, 2
        // Predicated region
        $region53: #{tpu_custom_call.1} parent=51 // pred_check
          %p384 = pneg %p130
        $region54: #{tpu_custom_call.1} parent=51 // pred_check_branch
          %386 = sbr.rel (%p384) target = $region56
        $region55: #{tpu_custom_call.1} parent=51 // pred_region
          %s387 = sand.u32 %s115, 1
          %s388 = scalar_lea.sflag [#allocation4], %s387
          %s389 = sand.u32 %s115, 1
          %s390 = smul.addr %s389, 64
          %s391 = scalar_lea.vmem [#allocation9], %s390
          %393 = dma.done %s388, 1024
        $region56: #{tpu_custom_call.1} parent=51 // pred_fallthru
          _
      $region52: #{tpu_custom_call.1} parent=5 // pred_fallthru
        _
    $region6: #{tpu_custom_call.1} parent=1 // loop_footer
      %s21 = sadd.s32 1, %s17
    $region7: #{tpu_custom_call.1} parent=1 // loop_footer_branch
      %16 = sbr.rel target = $region3
    $region8: #{tpu_custom_call.1} parent=1 // loop_exit
      _
    %394 = vsyncpa [#allocation3], 1
    %s395 = scalar_lea.sflag [#allocation3], 1
    %396 = vsyncpa %s395, 1
    %397 = vsyncpa [#allocation4], 1
    %s398 = scalar_lea.sflag [#allocation4], 1
    %399 = vsyncpa %s398, 1
    %400 = vsyncpa [#allocation5], 1
    %s401 = scalar_lea.sflag [#allocation5], 1
    %402 = vsyncpa %s401, 1
    %403 = vsyncpa [#allocation6], 1
    %s404 = scalar_lea.sflag [#allocation6], 1
    %405 = vsyncpa %s404, 1

</llo_original>
